<compile_context>
chip_gen: v6e
topology: v6e:2x2x1
jax: 0.10.0
libtpu: 0.0.40
codegen_flags: <defaults>
</compile_context>

<pallas_src>
import math

import jax
import jax.numpy as jnp
from jax.experimental import pallas as pl
from jax.experimental.pallas import tpu as pltpu


def _mlp_softmax_kernel(s_ref, sp_ref,
                        w1a_ref, w1b_ref, b1_ref,
                        w2_ref, b2_ref,
                        w3_ref, b3_ref,
                        out_ref):
    # In-kernel bf16 cast of the f32 activations (free; avoids a separate XLA
    # cast op and the associated extra HBM round trip).
    s_bf = s_ref[...].astype(jnp.bfloat16)
    sp_bf = sp_ref[...].astype(jnp.bfloat16)

    # linear_1 on the un-concatenated halves:
    #   cat([s, s'], -1) @ W1 == s @ W1[:S] + s' @ W1[S:]
    h = (jnp.dot(s_bf, w1a_ref[...], preferred_element_type=jnp.float32)
         + jnp.dot(sp_bf, w1b_ref[...], preferred_element_type=jnp.float32)
         + b1_ref[...])
    h = jnp.where(h > 0, h, 0.01 * h)                      # leaky_relu(0.01), f32

    # linear_2 + leaky_relu(0.01)
    h = jnp.dot(h.astype(jnp.bfloat16), w2_ref[...],
                preferred_element_type=jnp.float32) + b2_ref[...]
    h = jnp.where(h > 0, h, 0.01 * h)

    # linear_3 + softmax(dim=-1), numerically stable, f32, exact normalization.
    logits = jnp.dot(h.astype(jnp.bfloat16), w3_ref[...],
                     preferred_element_type=jnp.float32) + b3_ref[...]
    m = jnp.max(logits, axis=-1, keepdims=True)
    e = jnp.exp(logits - m)
    probs = e / jnp.sum(e, axis=-1, keepdims=True)
    out_ref[...] = probs.astype(out_ref.dtype)


def _round_up(x, m):
    return ((x + m - 1) // m) * m


def inv_dynamics_discrete_forward(s, s_prime, params, *, block_b=4096,
                                  out_dtype=jnp.bfloat16, min_pallas_batch=16):
    """params = dict(w1, b1, w2, b2, w3, b3); returns softmax probs (B, action_dim)."""
    w1, b1 = params["w1"], params["b1"]
    w2, b2 = params["w2"], params["b2"]
    w3, b3 = params["w3"], params["b3"]

    B, state_dim = s.shape
    H = w1.shape[1]
    A = w3.shape[1]

    # Tiny batches: launch overhead dominates — plain XLA is as fast and more
    # accurate (full f32 path).
    if B < min_pallas_batch:
        return _reference_forward(s, s_prime, params).astype(out_dtype)

    # Weights on the bf16 MXU path (tiny, fetched once, VMEM-resident across
    # the whole grid).  Biases stay f32 and are added to the f32 accumulator.
    # Activations are NOT cast in the wrapper — they go to the kernel as f32.
    w1a = w1[:state_dim].astype(jnp.bfloat16)     # top half of W1 (acts on s)
    w1b = w1[state_dim:].astype(jnp.bfloat16)     # bottom half (acts on s_prime)
    w2_c = w2.astype(jnp.bfloat16)
    w3_c = w3.astype(jnp.bfloat16)
    b1_c = b1.astype(jnp.float32)
    b2_c = b2.astype(jnp.float32)
    b3_c = b3.astype(jnp.float32)

    # Batch tile: multiple of 16 (bf16 sublane packing), large enough to
    # amortize the ~0.35 us/step overhead, and >= 2 grid steps so v7x's second
    # TensorCore participates (harmless no-op on v5e/v6e).
    n_steps = max(2, pl.cdiv(B, block_b))
    TB = min(_round_up(pl.cdiv(B, n_steps), 16), _round_up(B, 16))
    grid = (pl.cdiv(B, TB),)

    batch_spec = lambda d: pl.BlockSpec((TB, d), lambda i: (i, 0))
    fixed = lambda shape: pl.BlockSpec(shape, lambda i: (0, 0))

    out = pl.pallas_call(
        _mlp_softmax_kernel,
        out_shape=jax.ShapeDtypeStruct((B, A), out_dtype),
        grid_spec=pltpu.PrefetchScalarGridSpec(
            num_scalar_prefetch=0,
            grid=grid,
            in_specs=[
                batch_spec(state_dim),            # s       (f32)
                batch_spec(state_dim),            # s_prime (f32)
                fixed((state_dim, H)),            # w1a     (bf16)
                fixed((state_dim, H)),            # w1b     (bf16)
                fixed((1, H)),                    # b1      (f32)
                fixed((H, H)),                    # w2      (bf16)
                fixed((1, H)),                    # b2      (f32)
                fixed((H, A)),                    # w3      (bf16)
                fixed((1, A)),                    # b3      (f32)
            ],
            out_specs=batch_spec(A),
        ),
        compiler_params=pltpu.CompilerParams(
            dimension_semantics=("parallel",)),   # megacore sharding on v7x
    )(s, s_prime, w1a, w1b, b1_c, w2_c, b2_c, w3_c, b3_c)
    return out


def init_params(key, state_dim, hidden_dim, action_dim):
    """Deterministic init mimicking nn.Linear default: U(-1/sqrt(fan_in), 1/sqrt(fan_in))."""
    def linear(key, fan_in, fan_out):
        kw, kb = jax.random.split(key)
        bound = 1.0 / math.sqrt(fan_in)
        w = jax.random.uniform(kw, (fan_in, fan_out), jnp.float32, -bound, bound)
        b = jax.random.uniform(kb, (1, fan_out), jnp.float32, -bound, bound)
        return w, b

    k1, k2, k3 = jax.random.split(key, 3)
    w1, b1 = linear(k1, 2 * state_dim, hidden_dim)
    w2, b2 = linear(k2, hidden_dim, hidden_dim)
    w3, b3 = linear(k3, hidden_dim, action_dim)
    return dict(w1=w1, b1=b1, w2=w2, b2=b2, w3=w3, b3=b3)


def _reference_forward(s, s_prime, params, compute_dtype=jnp.float32):
    """Pure-JAX reference matching the PyTorch module.

    compute_dtype=jnp.float32  -> exact f32 port of the nn.Module.
    compute_dtype=jnp.bfloat16 -> same bf16-matmul / f32-accumulate recipe as
                                  the Pallas kernel (for a tight comparison).
    """
    cd = compute_dtype
    x = jnp.concatenate([s.astype(cd), s_prime.astype(cd)], axis=1)
    h = jnp.dot(x, params["w1"].astype(cd),
                preferred_element_type=jnp.float32) + params["b1"]
    h = jnp.where(h > 0, h, 0.01 * h)
    h = jnp.dot(h.astype(cd), params["w2"].astype(cd),
                preferred_element_type=jnp.float32) + params["b2"]
    h = jnp.where(h > 0, h, 0.01 * h)
    logits = jnp.dot(h.astype(cd), params["w3"].astype(cd),
                     preferred_element_type=jnp.float32) + params["b3"]
    return jax.nn.softmax(logits, axis=-1)


if __name__ == "__main__":
    state_dim, hidden_dim, action_dim = 16, 32, 8
    batch = 256   # -> TB=128, grid=(2,): exercises pipelining + megacore split

    key = jax.random.PRNGKey(0)
    kp, ks, ksp = jax.random.split(key, 3)

    params = init_params(kp, state_dim, hidden_dim, action_dim)
    s = jax.random.normal(ks, (batch, state_dim), jnp.float32)
    s_prime = jax.random.normal(ksp, (batch, state_dim), jnp.float32)

    probs = inv_dynamics_discrete_forward(s, s_prime, params)
    jax.block_until_ready(probs)
    probs_f32 = probs.astype(jnp.float32)

    # sanity: shape, exact-normalized rows (bf16 output rounding only),
    # tight match vs the bf16-matched reference, loose match vs full f32 ref.
    assert probs.shape == (batch, action_dim)
    assert bool(jnp.allclose(jnp.sum(probs_f32, axis=-1), 1.0, atol=1e-2))
    ref_bf16 = _reference_forward(s, s_prime, params, compute_dtype=jnp.bfloat16)
    assert bool(jnp.allclose(probs_f32, ref_bf16, atol=2e-2))
    ref_f32 = _reference_forward(s, s_prime, params, compute_dtype=jnp.float32)
    assert bool(jnp.allclose(probs_f32, ref_f32, atol=6e-2))

    print("KERNEL_OK")
</pallas_src>

<mosaic_0001>
module attributes {stable_mosaic.version = 11 : i64} {
  func.func @_mlp_softmax_kernel(%arg0: i32, %arg1: memref<128x16xf32, #tpu.memory_space<vmem>>, %arg2: memref<128x16xf32, #tpu.memory_space<vmem>>, %arg3: memref<16x32xbf16, #tpu.memory_space<vmem>>, %arg4: memref<16x32xbf16, #tpu.memory_space<vmem>>, %arg5: memref<1x32xf32, #tpu.memory_space<vmem>>, %arg6: memref<32x32xbf16, #tpu.memory_space<vmem>>, %arg7: memref<1x32xf32, #tpu.memory_space<vmem>>, %arg8: memref<32x8xbf16, #tpu.memory_space<vmem>>, %arg9: memref<1x8xf32, #tpu.memory_space<vmem>>, %arg10: memref<128x8xbf16, #tpu.memory_space<vmem>>) attributes {dimension_semantics = [#tpu.dimension_semantics<parallel>], iteration_bounds = array<i64: 2>, scalar_prefetch = 0 : i64, scratch_operands = 0 : i64, tpu.core_type = #tpu.core_type<tc>, window_params = [{transform_indices = @transform_0, window_bounds = array<i64: 128, 16>}, {transform_indices = @transform_1, window_bounds = array<i64: 128, 16>}, {pipeline_mode = #tpu.pipeline_mode<synchronous>, transform_indices = @transform_2, window_bounds = array<i64: 16, 32>}, {pipeline_mode = #tpu.pipeline_mode<synchronous>, transform_indices = @transform_3, window_bounds = array<i64: 16, 32>}, {pipeline_mode = #tpu.pipeline_mode<synchronous>, transform_indices = @transform_4, window_bounds = array<i64: 1, 32>}, {pipeline_mode = #tpu.pipeline_mode<synchronous>, transform_indices = @transform_5, window_bounds = array<i64: 32, 32>}, {pipeline_mode = #tpu.pipeline_mode<synchronous>, transform_indices = @transform_6, window_bounds = array<i64: 1, 32>}, {pipeline_mode = #tpu.pipeline_mode<synchronous>, transform_indices = @transform_7, window_bounds = array<i64: 32, 8>}, {pipeline_mode = #tpu.pipeline_mode<synchronous>, transform_indices = @transform_8, window_bounds = array<i64: 1, 8>}, {transform_indices = @transform_9, window_bounds = array<i64: 128, 8>}]} {
    %c0 = arith.constant 0 : index
    %c0_0 = arith.constant 0 : index
    %0 = vector.load %arg1[%c0, %c0_0] : memref<128x16xf32, #tpu.memory_space<vmem>>, vector<128x16xf32>
    %1 = arith.truncf %0 : vector<128x16xf32> to vector<128x16xbf16>
    %c0_1 = arith.constant 0 : index
    %c0_2 = arith.constant 0 : index
    %2 = vector.load %arg2[%c0_1, %c0_2] : memref<128x16xf32, #tpu.memory_space<vmem>>, vector<128x16xf32>
    %3 = arith.truncf %2 : vector<128x16xf32> to vector<128x16xbf16>
    %c0_3 = arith.constant 0 : index
    %c0_4 = arith.constant 0 : index
    %4 = vector.load %arg3[%c0_3, %c0_4] : memref<16x32xbf16, #tpu.memory_space<vmem>>, vector<16x32xbf16>
    %cst = arith.constant dense<0.000000e+00> : vector<128x32xf32>
    %5 = tpu.matmul %1, %4, %cst {dimension_numbers = #tpu.dot_dimension_numbers<[1], [0], [0], [1], [0, 0, 1, 1], [], []>} : vector<128x16xbf16>, vector<16x32xbf16>, vector<128x32xf32> -> vector<128x32xf32>
    %c0_5 = arith.constant 0 : index
    %c0_6 = arith.constant 0 : index
    %6 = vector.load %arg4[%c0_5, %c0_6] : memref<16x32xbf16, #tpu.memory_space<vmem>>, vector<16x32xbf16>
    %cst_7 = arith.constant dense<0.000000e+00> : vector<128x32xf32>
    %7 = tpu.matmul %3, %6, %cst_7 {dimension_numbers = #tpu.dot_dimension_numbers<[1], [0], [0], [1], [0, 0, 1, 1], [], []>} : vector<128x16xbf16>, vector<16x32xbf16>, vector<128x32xf32> -> vector<128x32xf32>
    %8 = arith.addf %5, %7 : vector<128x32xf32>
    %c0_8 = arith.constant 0 : index
    %c0_9 = arith.constant 0 : index
    %9 = vector.load %arg5[%c0_8, %c0_9] : memref<1x32xf32, #tpu.memory_space<vmem>>, vector<1x32xf32>
    %10 = vector.broadcast %9 : vector<1x32xf32> to vector<128x32xf32>
    %11 = arith.addf %8, %10 : vector<128x32xf32>
    %cst_10 = arith.constant 0.000000e+00 : f32
    %12 = vector.broadcast %cst_10 : f32 to vector<128x32xf32>
    %13 = arith.cmpf ogt, %11, %12 : vector<128x32xf32>
    %cst_11 = arith.constant 0.00999999977 : f32
    %14 = vector.broadcast %cst_11 : f32 to vector<128x32xf32>
    %15 = arith.mulf %14, %11 : vector<128x32xf32>
    %16 = arith.select %13, %11, %15 : vector<128x32xi1>, vector<128x32xf32>
    %17 = arith.truncf %16 : vector<128x32xf32> to vector<128x32xbf16>
    %c0_12 = arith.constant 0 : index
    %c0_13 = arith.constant 0 : index
    %18 = vector.load %arg6[%c0_12, %c0_13] : memref<32x32xbf16, #tpu.memory_space<vmem>>, vector<32x32xbf16>
    %cst_14 = arith.constant dense<0.000000e+00> : vector<128x32xf32>
    %19 = tpu.matmul %17, %18, %cst_14 {dimension_numbers = #tpu.dot_dimension_numbers<[1], [0], [0], [1], [0, 0, 1, 1], [], []>} : vector<128x32xbf16>, vector<32x32xbf16>, vector<128x32xf32> -> vector<128x32xf32>
    %c0_15 = arith.constant 0 : index
    %c0_16 = arith.constant 0 : index
    %20 = vector.load %arg7[%c0_15, %c0_16] : memref<1x32xf32, #tpu.memory_space<vmem>>, vector<1x32xf32>
    %21 = vector.broadcast %20 : vector<1x32xf32> to vector<128x32xf32>
    %22 = arith.addf %19, %21 : vector<128x32xf32>
    %cst_17 = arith.constant 0.000000e+00 : f32
    %23 = vector.broadcast %cst_17 : f32 to vector<128x32xf32>
    %24 = arith.cmpf ogt, %22, %23 : vector<128x32xf32>
    %cst_18 = arith.constant 0.00999999977 : f32
    %25 = vector.broadcast %cst_18 : f32 to vector<128x32xf32>
    %26 = arith.mulf %25, %22 : vector<128x32xf32>
    %27 = arith.select %24, %22, %26 : vector<128x32xi1>, vector<128x32xf32>
    %28 = arith.truncf %27 : vector<128x32xf32> to vector<128x32xbf16>
    %c0_19 = arith.constant 0 : index
    %c0_20 = arith.constant 0 : index
    %29 = vector.load %arg8[%c0_19, %c0_20] : memref<32x8xbf16, #tpu.memory_space<vmem>>, vector<32x8xbf16>
    %cst_21 = arith.constant dense<0.000000e+00> : vector<128x8xf32>
    %30 = tpu.matmul %28, %29, %cst_21 {dimension_numbers = #tpu.dot_dimension_numbers<[1], [0], [0], [1], [0, 0, 1, 1], [], []>} : vector<128x32xbf16>, vector<32x8xbf16>, vector<128x8xf32> -> vector<128x8xf32>
    %c0_22 = arith.constant 0 : index
    %c0_23 = arith.constant 0 : index
    %31 = vector.load %arg9[%c0_22, %c0_23] : memref<1x8xf32, #tpu.memory_space<vmem>>, vector<1x8xf32>
    %32 = vector.broadcast %31 : vector<1x8xf32> to vector<128x8xf32>
    %33 = arith.addf %30, %32 : vector<128x8xf32>
    %cst_24 = arith.constant dense<0xFF800000> : vector<128xf32>
    %34 = vector.multi_reduction <maximumf>, %33, %cst_24 [1] : vector<128x8xf32> to vector<128xf32>
    %35 = vector.shape_cast %34 : vector<128xf32> to vector<128x1xf32>
    %36 = vector.broadcast %35 : vector<128x1xf32> to vector<128x8xf32>
    %37 = arith.subf %33, %36 : vector<128x8xf32>
    %38 = math.exp %37 : vector<128x8xf32>
    %cst_25 = arith.constant dense<0.000000e+00> : vector<128xf32>
    %39 = vector.multi_reduction <add>, %38, %cst_25 [1] : vector<128x8xf32> to vector<128xf32>
    %40 = vector.shape_cast %39 : vector<128xf32> to vector<128x1xf32>
    %41 = vector.broadcast %40 : vector<128x1xf32> to vector<128x8xf32>
    %42 = arith.divf %38, %41 : vector<128x8xf32>
    %43 = arith.truncf %42 : vector<128x8xf32> to vector<128x8xbf16>
    %c0_26 = arith.constant 0 : index
    %c0_27 = arith.constant 0 : index
    %44 = vector.load %arg10[%c0_26, %c0_27] : memref<128x8xbf16, #tpu.memory_space<vmem>>, vector<128x8xbf16>
    tpu.vector_store %arg10[%c0_26, %c0_27], %43 {strides = array<i32>} : memref<128x8xbf16, #tpu.memory_space<vmem>>, vector<128x8xbf16>,
    return
  }
  func.func @transform_0(%arg0: i32) -> (i32, i32) {
    %c0_i32 = arith.constant 0 : i32
    %c0_i32_0 = arith.constant 0 : i32
    return %arg0, %c0_i32 : i32, i32
  }
  func.func @transform_1(%arg0: i32) -> (i32, i32) {
    %c0_i32 = arith.constant 0 : i32
    %c0_i32_0 = arith.constant 0 : i32
    return %arg0, %c0_i32 : i32, i32
  }
  func.func @transform_2(%arg0: i32) -> (i32, i32) {
    %c0_i32 = arith.constant 0 : i32
    %c0_i32_0 = arith.constant 0 : i32
    %c0_i32_1 = arith.constant 0 : i32
    return %c0_i32, %c0_i32_0 : i32, i32
  }
  func.func @transform_3(%arg0: i32) -> (i32, i32) {
    %c0_i32 = arith.constant 0 : i32
    %c0_i32_0 = arith.constant 0 : i32
    %c0_i32_1 = arith.constant 0 : i32
    return %c0_i32, %c0_i32_0 : i32, i32
  }
  func.func @transform_4(%arg0: i32) -> (i32, i32) {
    %c0_i32 = arith.constant 0 : i32
    %c0_i32_0 = arith.constant 0 : i32
    %c0_i32_1 = arith.constant 0 : i32
    return %c0_i32, %c0_i32_0 : i32, i32
  }
  func.func @transform_5(%arg0: i32) -> (i32, i32) {
    %c0_i32 = arith.constant 0 : i32
    %c0_i32_0 = arith.constant 0 : i32
    %c0_i32_1 = arith.constant 0 : i32
    return %c0_i32, %c0_i32_0 : i32, i32
  }
  func.func @transform_6(%arg0: i32) -> (i32, i32) {
    %c0_i32 = arith.constant 0 : i32
    %c0_i32_0 = arith.constant 0 : i32
    %c0_i32_1 = arith.constant 0 : i32
    return %c0_i32, %c0_i32_0 : i32, i32
  }
  func.func @transform_7(%arg0: i32) -> (i32, i32) {
    %c0_i32 = arith.constant 0 : i32
    %c0_i32_0 = arith.constant 0 : i32
    %c0_i32_1 = arith.constant 0 : i32
    return %c0_i32, %c0_i32_0 : i32, i32
  }
  func.func @transform_8(%arg0: i32) -> (i32, i32) {
    %c0_i32 = arith.constant 0 : i32
    %c0_i32_0 = arith.constant 0 : i32
    %c0_i32_1 = arith.constant 0 : i32
    return %c0_i32, %c0_i32_0 : i32, i32
  }
  func.func @transform_9(%arg0: i32) -> (i32, i32) {
    %c0_i32 = arith.constant 0 : i32
    %c0_i32_0 = arith.constant 0 : i32
    return %arg0, %c0_i32 : i32, i32
  }
}

</mosaic_0001>

<llo_original>
// kernel: tpu_custom_call.1
$region0: #{tpu_custom_call.1}
  #allocation0 [shape = 'u32[]', space=smem, size = 0x4, offset = 0x4, fixed_abs, tag = 'smem constant byte address 0x4 - core index']
  #allocation1 [shape = 'u32[144,128]{1,0:T(1,128)}', space=vmem, size = 0x12000, scoped, tag = 'internal scratch']
  %s0 = inlined_call_operand.vmem [shape: f32[256,16], index: 0, kind: input, shape index: {}]
  %s1 = inlined_call_operand.vmem [shape: f32[256,16], index: 1, kind: input, shape index: {}]
  %s2 = inlined_call_operand.vmem [shape: bf16[16,32], index: 2, kind: input, shape index: {}]
  %s3 = inlined_call_operand.vmem [shape: bf16[16,32], index: 3, kind: input, shape index: {}]
  %s4 = inlined_call_operand.vmem [shape: f32[1,32], index: 4, kind: input, shape index: {}]
  %s5 = inlined_call_operand.vmem [shape: bf16[32,32], index: 5, kind: input, shape index: {}]
  %s6 = inlined_call_operand.vmem [shape: f32[1,32], index: 6, kind: input, shape index: {}]
  %s7 = inlined_call_operand.vmem [shape: bf16[32,8], index: 7, kind: input, shape index: {}]
  %s8 = inlined_call_operand.vmem [shape: f32[1,8], index: 8, kind: input, shape index: {}]
  %s9 = inlined_call_operand.vmem [shape: bf16[256,8], index: 9, kind: output, shape index: {}]
  %s10 = sld [smem:[#allocation0]]
  $region69: #{tpu_custom_call.1} parent=0
    _
  %s12 = ssub.s32 1, %s10
  %s13 = scalar_select 0, %s12, %s10
  loop: start=0, step=1, limit=4
  $region2: #{tpu_custom_call.1} parent=0 // loop_pre_header
    _
  $region3: #{tpu_custom_call.1} parent=0 // loop_header
    %s15 = sphi 0, %s19
    %p16 = scmp.ge.s32.totalorder %s15, 4
    %s25 = sphi 0, %s27
    %s28 = sphi 0, %s25
    %s29 = sphi 0, %s28
    %s45 = sphi 0, %s29
    %s51 = sphi 0, %s53
    %s54 = sphi 0, %s51
    %s55 = sphi 0, %s54
    %s71 = sphi 0, %s55
    %s75 = sphi 0, %s75
    %s77 = sphi 0, %s75
    %s78 = sphi 0, %s77
    %s92 = sphi 0, %s78
    %s96 = sphi 0, %s96
    %s98 = sphi 0, %s96
    %s99 = sphi 0, %s98
    %s113 = sphi 0, %s99
    %s117 = sphi 0, %s117
    %s119 = sphi 0, %s117
    %s120 = sphi 0, %s119
    %s134 = sphi 0, %s120
    %s138 = sphi 0, %s138
    %s140 = sphi 0, %s138
    %s141 = sphi 0, %s140
    %s155 = sphi 0, %s141
    %s159 = sphi 0, %s159
    %s161 = sphi 0, %s159
    %s162 = sphi 0, %s161
    %s176 = sphi 0, %s162
    %s180 = sphi 0, %s180
    %s182 = sphi 0, %s180
    %s183 = sphi 0, %s182
    %s197 = sphi 0, %s183
    %s201 = sphi 0, %s201
    %s203 = sphi 0, %s201
    %s204 = sphi 0, %s203
    %s218 = sphi 0, %s204
    %s224 = sphi 0, %s226
    %s227 = sphi 0, %s224
    %s228 = sphi 0, %s227
    %s244 = sphi 0, %s228
  $region4: #{tpu_custom_call.1} parent=0 // loop_header_branch
    %18 = sbr.rel (%p16) target = $region8
  $region5: #{tpu_custom_call.1} parent=0 // loop_body
    %s20 = ssub.s32 %s15, 1
    %s21 = ssub.s32 %s15, 2
    %s22 = sadd.s32 %s15, 1
    %s23 = ssub.s32 %s15, %s22
    %p24 = scmp.eq.s32.totalorder %s23, 0
    %s26 = sadd.s32 %s25, 1
    %s27 = scalar_select %p24, %s25, %s26
    %p30 = pneg %p24
    %p31 = scmp.eq.s32.totalorder %s15, 1
    %p32 = por %p30, %p31
    %p33 = scmp.ne.s32.totalorder %s25, %s28
    %p34 = scmp.eq.s32.totalorder %s15, 0
    %p35 = por %p33, %p34
    %p36 = scmp.ne.s32.totalorder %s25, %s28
    %p37 = scmp.eq.s32.totalorder %s20, 1
    %p38 = por %p36, %p37
    %p39 = scmp.ne.s32.totalorder %s28, %s29
    %p40 = scmp.eq.s32.totalorder %s20, 0
    %p41 = por %p39, %p40
    %p42 = scmp.ne.s32.totalorder %s28, %s29
    %p43 = scmp.eq.s32.totalorder %s21, 1
    %p44 = por %p42, %p43
    %p46 = scmp.ne.s32.totalorder %s29, %s45
    %p47 = scmp.eq.s32.totalorder %s21, 0
    %p48 = por %p46, %p47
    %s49 = ssub.s32 %s15, %s22
    %p50 = scmp.eq.s32.totalorder %s49, 0
    %s52 = sadd.s32 %s51, 1
    %s53 = scalar_select %p50, %s51, %s52
    %p56 = pneg %p50
    %p57 = scmp.eq.s32.totalorder %s15, 1
    %p58 = por %p56, %p57
    %p59 = scmp.ne.s32.totalorder %s51, %s54
    %p60 = scmp.eq.s32.totalorder %s15, 0
    %p61 = por %p59, %p60
    %p62 = scmp.ne.s32.totalorder %s51, %s54
    %p63 = scmp.eq.s32.totalorder %s20, 1
    %p64 = por %p62, %p63
    %p65 = scmp.ne.s32.totalorder %s54, %s55
    %p66 = scmp.eq.s32.totalorder %s20, 0
    %p67 = por %p65, %p66
    %p68 = scmp.ne.s32.totalorder %s54, %s55
    %p69 = scmp.eq.s32.totalorder %s21, 1
    %p70 = por %p68, %p69
    %p72 = scmp.ne.s32.totalorder %s55, %s71
    %p73 = scmp.eq.s32.totalorder %s21, 0
    %p74 = por %p72, %p73
    %s76 = sadd.s32 %s75, 1
    %p79 = scmp.eq.s32.totalorder %s15, 1
    %p80 = scmp.ne.s32.totalorder %s75, %s77
    %p81 = scmp.eq.s32.totalorder %s15, 0
    %p82 = por %p80, %p81
    %p83 = scmp.ne.s32.totalorder %s75, %s77
    %p84 = scmp.eq.s32.totalorder %s20, 1
    %p85 = por %p83, %p84
    %p86 = scmp.ne.s32.totalorder %s77, %s78
    %p87 = scmp.eq.s32.totalorder %s20, 0
    %p88 = por %p86, %p87
    %p89 = scmp.ne.s32.totalorder %s77, %s78
    %p90 = scmp.eq.s32.totalorder %s21, 1
    %p91 = por %p89, %p90
    %p93 = scmp.ne.s32.totalorder %s78, %s92
    %p94 = scmp.eq.s32.totalorder %s21, 0
    %p95 = por %p93, %p94
    %s97 = sadd.s32 %s96, 1
    %p100 = scmp.eq.s32.totalorder %s15, 1
    %p101 = scmp.ne.s32.totalorder %s96, %s98
    %p102 = scmp.eq.s32.totalorder %s15, 0
    %p103 = por %p101, %p102
    %p104 = scmp.ne.s32.totalorder %s96, %s98
    %p105 = scmp.eq.s32.totalorder %s20, 1
    %p106 = por %p104, %p105
    %p107 = scmp.ne.s32.totalorder %s98, %s99
    %p108 = scmp.eq.s32.totalorder %s20, 0
    %p109 = por %p107, %p108
    %p110 = scmp.ne.s32.totalorder %s98, %s99
    %p111 = scmp.eq.s32.totalorder %s21, 1
    %p112 = por %p110, %p111
    %p114 = scmp.ne.s32.totalorder %s99, %s113
    %p115 = scmp.eq.s32.totalorder %s21, 0
    %p116 = por %p114, %p115
    %s118 = sadd.s32 %s117, 1
    %p121 = scmp.eq.s32.totalorder %s15, 1
    %p122 = scmp.ne.s32.totalorder %s117, %s119
    %p123 = scmp.eq.s32.totalorder %s15, 0
    %p124 = por %p122, %p123
    %p125 = scmp.ne.s32.totalorder %s117, %s119
    %p126 = scmp.eq.s32.totalorder %s20, 1
    %p127 = por %p125, %p126
    %p128 = scmp.ne.s32.totalorder %s119, %s120
    %p129 = scmp.eq.s32.totalorder %s20, 0
    %p130 = por %p128, %p129
    %p131 = scmp.ne.s32.totalorder %s119, %s120
    %p132 = scmp.eq.s32.totalorder %s21, 1
    %p133 = por %p131, %p132
    %p135 = scmp.ne.s32.totalorder %s120, %s134
    %p136 = scmp.eq.s32.totalorder %s21, 0
    %p137 = por %p135, %p136
    %s139 = sadd.s32 %s138, 1
    %p142 = scmp.eq.s32.totalorder %s15, 1
    %p143 = scmp.ne.s32.totalorder %s138, %s140
    %p144 = scmp.eq.s32.totalorder %s15, 0
    %p145 = por %p143, %p144
    %p146 = scmp.ne.s32.totalorder %s138, %s140
    %p147 = scmp.eq.s32.totalorder %s20, 1
    %p148 = por %p146, %p147
    %p149 = scmp.ne.s32.totalorder %s140, %s141
    %p150 = scmp.eq.s32.totalorder %s20, 0
    %p151 = por %p149, %p150
    %p152 = scmp.ne.s32.totalorder %s140, %s141
    %p153 = scmp.eq.s32.totalorder %s21, 1
    %p154 = por %p152, %p153
    %p156 = scmp.ne.s32.totalorder %s141, %s155
    %p157 = scmp.eq.s32.totalorder %s21, 0
    %p158 = por %p156, %p157
    %s160 = sadd.s32 %s159, 1
    %p163 = scmp.eq.s32.totalorder %s15, 1
    %p164 = scmp.ne.s32.totalorder %s159, %s161
    %p165 = scmp.eq.s32.totalorder %s15, 0
    %p166 = por %p164, %p165
    %p167 = scmp.ne.s32.totalorder %s159, %s161
    %p168 = scmp.eq.s32.totalorder %s20, 1
    %p169 = por %p167, %p168
    %p170 = scmp.ne.s32.totalorder %s161, %s162
    %p171 = scmp.eq.s32.totalorder %s20, 0
    %p172 = por %p170, %p171
    %p173 = scmp.ne.s32.totalorder %s161, %s162
    %p174 = scmp.eq.s32.totalorder %s21, 1
    %p175 = por %p173, %p174
    %p177 = scmp.ne.s32.totalorder %s162, %s176
    %p178 = scmp.eq.s32.totalorder %s21, 0
    %p179 = por %p177, %p178
    %s181 = sadd.s32 %s180, 1
    %p184 = scmp.eq.s32.totalorder %s15, 1
    %p185 = scmp.ne.s32.totalorder %s180, %s182
    %p186 = scmp.eq.s32.totalorder %s15, 0
    %p187 = por %p185, %p186
    %p188 = scmp.ne.s32.totalorder %s180, %s182
    %p189 = scmp.eq.s32.totalorder %s20, 1
    %p190 = por %p188, %p189
    %p191 = scmp.ne.s32.totalorder %s182, %s183
    %p192 = scmp.eq.s32.totalorder %s20, 0
    %p193 = por %p191, %p192
    %p194 = scmp.ne.s32.totalorder %s182, %s183
    %p195 = scmp.eq.s32.totalorder %s21, 1
    %p196 = por %p194, %p195
    %p198 = scmp.ne.s32.totalorder %s183, %s197
    %p199 = scmp.eq.s32.totalorder %s21, 0
    %p200 = por %p198, %p199
    %s202 = sadd.s32 %s201, 1
    %p205 = scmp.eq.s32.totalorder %s15, 1
    %p206 = scmp.ne.s32.totalorder %s201, %s203
    %p207 = scmp.eq.s32.totalorder %s15, 0
    %p208 = por %p206, %p207
    %p209 = scmp.ne.s32.totalorder %s201, %s203
    %p210 = scmp.eq.s32.totalorder %s20, 1
    %p211 = por %p209, %p210
    %p212 = scmp.ne.s32.totalorder %s203, %s204
    %p213 = scmp.eq.s32.totalorder %s20, 0
    %p214 = por %p212, %p213
    %p215 = scmp.ne.s32.totalorder %s203, %s204
    %p216 = scmp.eq.s32.totalorder %s21, 1
    %p217 = por %p215, %p216
    %p219 = scmp.ne.s32.totalorder %s204, %s218
    %p220 = scmp.eq.s32.totalorder %s21, 0
    %p221 = por %p219, %p220
    %s222 = ssub.s32 %s15, %s22
    %p223 = scmp.eq.s32.totalorder %s222, 0
    %s225 = sadd.s32 %s224, 1
    %s226 = scalar_select %p223, %s224, %s225
    %p229 = pneg %p223
    %p230 = scmp.eq.s32.totalorder %s15, 1
    %p231 = por %p229, %p230
    %p232 = scmp.ne.s32.totalorder %s224, %s227
    %p233 = scmp.eq.s32.totalorder %s15, 0
    %p234 = por %p232, %p233
    %p235 = scmp.ne.s32.totalorder %s224, %s227
    %p236 = scmp.eq.s32.totalorder %s20, 1
    %p237 = por %p235, %p236
    %p238 = scmp.ne.s32.totalorder %s227, %s228
    %p239 = scmp.eq.s32.totalorder %s20, 0
    %p240 = por %p238, %p239
    %p241 = scmp.ne.s32.totalorder %s227, %s228
    %p242 = scmp.eq.s32.totalorder %s21, 1
    %p243 = por %p241, %p242
    %p245 = scmp.ne.s32.totalorder %s228, %s244
    %p246 = scmp.eq.s32.totalorder %s21, 0
    %p247 = por %p245, %p246
    %p248 = scmp.le.s32.totalorder 1, %s15
    %p249 = scmp.lt.s32.totalorder %s15, 3
    %p250 = pnand %p248, %p249
    %p251 = pneg %p250
    // Predicated region
    $region9: #{tpu_custom_call.1} parent=5 // pred_check
      _
    $region10: #{tpu_custom_call.1} parent=5 // pred_check_branch
      %253 = sbr.rel (%p250) target = $region12
    $region11: #{tpu_custom_call.1} parent=5 // pred_region
      %s254 = ssub.s32 %s15, 1
      // Predicated region
      $region13: #{tpu_custom_call.1} parent=11 // pred_check
        %p255 = pneg %p88
      $region14: #{tpu_custom_call.1} parent=11 // pred_check_branch
        %257 = sbr.rel (%p255) target = $region16
      $region15: #{tpu_custom_call.1} parent=11 // pred_region
        _
      $region16: #{tpu_custom_call.1} parent=11 // pred_fallthru
        _
      // Predicated region
      $region17: #{tpu_custom_call.1} parent=11 // pred_check
        %p258 = pneg %p109
      $region18: #{tpu_custom_call.1} parent=11 // pred_check_branch
        %260 = sbr.rel (%p258) target = $region20
      $region19: #{tpu_custom_call.1} parent=11 // pred_region
        _
      $region20: #{tpu_custom_call.1} parent=11 // pred_fallthru
        _
      // Predicated region
      $region21: #{tpu_custom_call.1} parent=11 // pred_check
        %p261 = pneg %p130
      $region22: #{tpu_custom_call.1} parent=11 // pred_check_branch
        %263 = sbr.rel (%p261) target = $region24
      $region23: #{tpu_custom_call.1} parent=11 // pred_region
        _
      $region24: #{tpu_custom_call.1} parent=11 // pred_fallthru
        _
      // Predicated region
      $region25: #{tpu_custom_call.1} parent=11 // pred_check
        %p264 = pneg %p151
      $region26: #{tpu_custom_call.1} parent=11 // pred_check_branch
        %266 = sbr.rel (%p264) target = $region28
      $region27: #{tpu_custom_call.1} parent=11 // pred_region
        _
      $region28: #{tpu_custom_call.1} parent=11 // pred_fallthru
        _
      // Predicated region
      $region29: #{tpu_custom_call.1} parent=11 // pred_check
        %p267 = pneg %p172
      $region30: #{tpu_custom_call.1} parent=11 // pred_check_branch
        %269 = sbr.rel (%p267) target = $region32
      $region31: #{tpu_custom_call.1} parent=11 // pred_region
        _
      $region32: #{tpu_custom_call.1} parent=11 // pred_fallthru
        _
      // Predicated region
      $region33: #{tpu_custom_call.1} parent=11 // pred_check
        %p270 = pneg %p193
      $region34: #{tpu_custom_call.1} parent=11 // pred_check_branch
        %272 = sbr.rel (%p270) target = $region36
      $region35: #{tpu_custom_call.1} parent=11 // pred_region
        _
      $region36: #{tpu_custom_call.1} parent=11 // pred_fallthru
        _
      // Predicated region
      $region37: #{tpu_custom_call.1} parent=11 // pred_check
        %p273 = pneg %p214
      $region38: #{tpu_custom_call.1} parent=11 // pred_check_branch
        %275 = sbr.rel (%p273) target = $region40
      $region39: #{tpu_custom_call.1} parent=11 // pred_region
        _
      $region40: #{tpu_custom_call.1} parent=11 // pred_fallthru
        _
    $region12: #{tpu_custom_call.1} parent=5 // pred_fallthru
      _
    %p276 = scmp.lt.s32.totalorder %s15, 2
    // Predicated region
    $region41: #{tpu_custom_call.1} parent=5 // pred_check
      %p277 = pneg %p276
    $region42: #{tpu_custom_call.1} parent=5 // pred_check_branch
      %279 = sbr.rel (%p277) target = $region44
    $region43: #{tpu_custom_call.1} parent=5 // pred_region
      // Predicated region
      $region45: #{tpu_custom_call.1} parent=43 // pred_check
        %p280 = pneg %p35
      $region46: #{tpu_custom_call.1} parent=43 // pred_check_branch
        %282 = sbr.rel (%p280) target = $region48
      $region47: #{tpu_custom_call.1} parent=43 // pred_region
        %s283 = smul.u32 16, %s15
        %p284 = scmp.lt.s32.totalorder %s283, 31
        %s285 = scalar_select %p284, %s283, 31
        %s286 = smul.addr %s285, 8
        %s287 = scalar_lea.vmem %s0, %s286
        %s288 = smul.u32 16, %s15
      $region48: #{tpu_custom_call.1} parent=43 // pred_fallthru
        _
      // Predicated region
      $region49: #{tpu_custom_call.1} parent=43 // pred_check
        %p289 = pneg %p61
      $region50: #{tpu_custom_call.1} parent=43 // pred_check_branch
        %291 = sbr.rel (%p289) target = $region52
      $region51: #{tpu_custom_call.1} parent=43 // pred_region
        %s292 = smul.u32 16, %s15
        %p293 = scmp.lt.s32.totalorder %s292, 31
        %s294 = scalar_select %p293, %s292, 31
        %s295 = smul.addr %s294, 8
        %s296 = scalar_lea.vmem %s1, %s295
        %s297 = smul.u32 16, %s15
      $region52: #{tpu_custom_call.1} parent=43 // pred_fallthru
        _
    $region44: #{tpu_custom_call.1} parent=5 // pred_fallthru
      _
    %p298 = scmp.le.s32.totalorder 1, %s15
    %p299 = scmp.lt.s32.totalorder %s15, 3
    %p300 = pnand %p298, %p299
    %p301 = pneg %p300
    // Predicated region
    $region53: #{tpu_custom_call.1} parent=5 // pred_check
      _
    $region54: #{tpu_custom_call.1} parent=5 // pred_check_branch
      %303 = sbr.rel (%p300) target = $region56
    $region55: #{tpu_custom_call.1} parent=5 // pred_region
      %s304 = ssub.s32 %s15, 1
      %s305 = smul.u32 16, %s20
      %p306 = scmp.lt.s32.totalorder %s305, 31
      %s307 = scalar_select %p306, %s305, 31
      %s308 = smul.addr %s307, 8
      %s309 = scalar_lea.vmem %s0, %s308
      %p310 = pneg %p41
      %p311 = pneg %p38
      %s312 = smul.u32 16, %s20
      %p313 = scmp.lt.s32.totalorder %s312, 31
      %s314 = scalar_select %p313, %s312, 31
      %s315 = smul.addr %s314, 8
      %s316 = scalar_lea.vmem %s1, %s315
      %p317 = pneg %p67
      %p318 = pneg %p64
      %p319 = pneg %p88
      %p320 = pneg %p85
      %p321 = pneg %p109
      %p322 = pneg %p106
      %p323 = pneg %p130
      %p324 = pneg %p127
      %p325 = pneg %p151
      %p326 = pneg %p148
      %p327 = pneg %p172
      %p328 = pneg %p169
      %p329 = pneg %p193
      %p330 = pneg %p190
      %p331 = pneg %p214
      %p332 = pneg %p211
      %p333 = pneg %p240
      %p334 = pneg %p237
      %s335 = smul.u32 16, %s20
      %p336 = scmp.lt.s32.totalorder %s335, 31
      %s337 = scalar_select %p336, %s335, 31
      %s338 = smul.addr %s337, 4
      %s339 = scalar_lea.vmem %s9, %s338
      %s340 = smul.u32 16, %s20
      %p341 = scmp.lt.s32.totalorder %s340, 31
      %s342 = scalar_select %p341, %s340, 31
      %s343 = smul.addr %s342, 8
      %s344 = scalar_lea.vmem %s0, %s343
      %s345 = smul.u32 16, %s20
      %s346 = smul.u32 16, %s20
      %p347 = scmp.lt.s32.totalorder %s346, 31
      %s348 = scalar_select %p347, %s346, 31
      %s349 = smul.addr %s348, 8
      %s350 = scalar_lea.vmem %s1, %s349
      %s351 = smul.u32 16, %s20
      %s352 = smul.u32 16, %s20
      %p353 = scmp.lt.s32.totalorder %s352, 31
      %s354 = scalar_select %p353, %s352, 31
      %s355 = smul.addr %s354, 4
      %s356 = scalar_lea.vmem %s9, %s355
      %s357 = smul.u32 16, %s20
      %v359 = vld [vmem:[%s344] sm:$0xff]
      %v360 = vld [vmem:[%s344 + $0x8] sm:$0xff]
      %v361 = vld [vmem:[%s344 + $0x10] sm:$0xff]
      %v362 = vld [vmem:[%s344 + $0x18] sm:$0xff]
      %v363 = vld [vmem:[%s344 + $0x20] sm:$0xff]
      %v364 = vld [vmem:[%s344 + $0x28] sm:$0xff]
      %v365 = vld [vmem:[%s344 + $0x30] sm:$0xff]
      %v366 = vld [vmem:[%s344 + $0x38] sm:$0xff]
      %v367 = vld [vmem:[%s344 + $0x40] sm:$0xff]
      %v368 = vld [vmem:[%s344 + $0x48] sm:$0xff]
      %v369 = vld [vmem:[%s344 + $0x50] sm:$0xff]
      %v370 = vld [vmem:[%s344 + $0x58] sm:$0xff]
      %v371 = vld [vmem:[%s344 + $0x60] sm:$0xff]
      %v372 = vld [vmem:[%s344 + $0x68] sm:$0xff]
      %v373 = vld [vmem:[%s344 + $0x70] sm:$0xff]
      %v374 = vld [vmem:[%s344 + $0x78] sm:$0xff]
      %v375 = vpack.c.bf16 %v360, %v359
      %v376 = vpack.c.bf16 %v362, %v361
      %v377 = vpack.c.bf16 %v364, %v363
      %v378 = vpack.c.bf16 %v366, %v365
      %v379 = vpack.c.bf16 %v368, %v367
      %v380 = vpack.c.bf16 %v370, %v369
      %v381 = vpack.c.bf16 %v372, %v371
      %v382 = vpack.c.bf16 %v374, %v373
      %v383 = vld [vmem:[%s350] sm:$0xff]
      %v384 = vld [vmem:[%s350 + $0x8] sm:$0xff]
      %v385 = vld [vmem:[%s350 + $0x10] sm:$0xff]
      %v386 = vld [vmem:[%s350 + $0x18] sm:$0xff]
      %v387 = vld [vmem:[%s350 + $0x20] sm:$0xff]
      %v388 = vld [vmem:[%s350 + $0x28] sm:$0xff]
      %v389 = vld [vmem:[%s350 + $0x30] sm:$0xff]
      %v390 = vld [vmem:[%s350 + $0x38] sm:$0xff]
      %v391 = vld [vmem:[%s350 + $0x40] sm:$0xff]
      %v392 = vld [vmem:[%s350 + $0x48] sm:$0xff]
      %v393 = vld [vmem:[%s350 + $0x50] sm:$0xff]
      %v394 = vld [vmem:[%s350 + $0x58] sm:$0xff]
      %v395 = vld [vmem:[%s350 + $0x60] sm:$0xff]
      %v396 = vld [vmem:[%s350 + $0x68] sm:$0xff]
      %v397 = vld [vmem:[%s350 + $0x70] sm:$0xff]
      %v398 = vld [vmem:[%s350 + $0x78] sm:$0xff]
      %v399 = vpack.c.bf16 %v384, %v383
      %v400 = vpack.c.bf16 %v386, %v385
      %v401 = vpack.c.bf16 %v388, %v387
      %v402 = vpack.c.bf16 %v390, %v389
      %v403 = vpack.c.bf16 %v392, %v391
      %v404 = vpack.c.bf16 %v394, %v393
      %v405 = vpack.c.bf16 %v396, %v395
      %v406 = vpack.c.bf16 %v398, %v397
      %v407 = vld [vmem:[%s2] sm:$0xf]
      %v408 = vld [vmem:[%s2 + $0x4] sm:$0xf]
      %v409 = vld [vmem:[%s3] sm:$0xf]
      %v410 = vld [vmem:[%s3 + $0x4] sm:$0xf]
      %v413 = vunpack.c.l.b16 %v409
      %v414 = vunpack.c.l.b16 %v410
      %v415 = vpack.c.b16 %v414, %v413
      %vm417 = vcmask 130048
      %v419 = vsel %vm417, %v399, 0
      %v422 = vsel %vm417, %v400, 0
      %v425 = vsel %vm417, %v401, 0
      %v428 = vsel %vm417, %v402, 0
      %v431 = vsel %vm417, %v403, 0
      %v434 = vsel %vm417, %v404, 0
      %v437 = vsel %vm417, %v405, 0
      %v440 = vsel %vm417, %v406, 0
      %442 = vmatprep.subr.bf16.mxu0 0
      %443 = vmatpush1.bf16.msra.mxu0 0
      %444 = vmatprep.subr.bf16.mxu0 0
      %445 = vmatpush1.bf16.msra.mxu0 0
      %446 = vmatprep.subr.bf16.mxu0 0
      %447 = vmatpush1.bf16.msra.mxu0 0
      %448 = vmatprep.subr.bf16.mxu0 0
      %449 = vmatpush1.bf16.msra.mxu0 0
      %450 = vmatprep.subr.bf16.mxu0 0
      %451 = vmatpush1.bf16.msra.mxu0 0
      %452 = vmatprep.subr.bf16.mxu0 0
      %453 = vmatpush1.bf16.msra.mxu0 0
      %454 = vmatprep.subr.bf16.mxu0 0
      %455 = vmatpush1.bf16.msra.mxu0 0
      %456 = vmatprep.subr.bf16.mxu0 0
      %457 = vmatpush1.bf16.msra.mxu0 %v415
      %458 = vmatprep.subr.bf16.mxu0 0
      %459 = vmatpush2.bf16.msra.mxu0 0
      %460 = vmatprep.subr.bf16.mxu0 0
      %461 = vmatpush2.bf16.msra.mxu0 0
      %462 = vmatprep.subr.bf16.mxu0 0
      %463 = vmatpush2.bf16.msra.mxu0 0
      %464 = vmatprep.subr.bf16.mxu0 0
      %465 = vmatpush2.bf16.msra.mxu0 0
      %466 = vmatprep.subr.bf16.mxu0 0
      %467 = vmatpush2.bf16.msra.mxu0 0
      %468 = vmatprep.subr.bf16.mxu0 0
      %469 = vmatpush2.bf16.msra.mxu0 0
      %470 = vmatprep.subr.bf16.mxu0 0
      %471 = vmatpush2.bf16.msra.mxu0 0
      %472 = vmatprep.subr.bf16.mxu0 0
      %473 = vmatpush2.bf16.msra.mxu0 0
      %474 = vmatprep.mubr.bf16.mxu0 0
      %475 = vmatmul.mubr.bf16.gmra.mxu0 %v419
      %v476 = vpop.f32.mrf.mxu0
      %v477 = vadd.f32 0.0, %v476
      %v478 = vpop.f32.mrf.mxu0
      %v479 = vpop.f32.mrf.mxu0
      %v480 = vadd.f32 0.0, %v479
      %v481 = vpop.f32.mrf.mxu0
      %482 = vmatprep.mubr.bf16.mxu0 0
      %483 = vmatmul.mubr.bf16.gmra.mxu0 %v422
      %v484 = vpop.f32.mrf.mxu0
      %v485 = vadd.f32 0.0, %v484
      %v486 = vpop.f32.mrf.mxu0
      %v487 = vpop.f32.mrf.mxu0
      %v488 = vadd.f32 0.0, %v487
      %v489 = vpop.f32.mrf.mxu0
      %490 = vmatprep.mubr.bf16.mxu0 0
      %491 = vmatmul.mubr.bf16.gmra.mxu0 %v425
      %v492 = vpop.f32.mrf.mxu0
      %v493 = vadd.f32 0.0, %v492
      %v494 = vpop.f32.mrf.mxu0
      %v495 = vpop.f32.mrf.mxu0
      %v496 = vadd.f32 0.0, %v495
      %v497 = vpop.f32.mrf.mxu0
      %498 = vmatprep.mubr.bf16.mxu0 0
      %499 = vmatmul.mubr.bf16.gmra.mxu0 %v428
      %v500 = vpop.f32.mrf.mxu0
      %v501 = vadd.f32 0.0, %v500
      %v502 = vpop.f32.mrf.mxu0
      %v503 = vpop.f32.mrf.mxu0
      %v504 = vadd.f32 0.0, %v503
      %v505 = vpop.f32.mrf.mxu0
      %506 = vmatprep.mubr.bf16.mxu0 0
      %507 = vmatmul.mubr.bf16.gmra.mxu0 %v431
      %v508 = vpop.f32.mrf.mxu0
      %v509 = vadd.f32 0.0, %v508
      %v510 = vpop.f32.mrf.mxu0
      %v511 = vpop.f32.mrf.mxu0
      %v512 = vadd.f32 0.0, %v511
      %v513 = vpop.f32.mrf.mxu0
      %514 = vmatprep.mubr.bf16.mxu0 0
      %515 = vmatmul.mubr.bf16.gmra.mxu0 %v434
      %v516 = vpop.f32.mrf.mxu0
      %v517 = vadd.f32 0.0, %v516
      %v518 = vpop.f32.mrf.mxu0
      %v519 = vpop.f32.mrf.mxu0
      %v520 = vadd.f32 0.0, %v519
      %v521 = vpop.f32.mrf.mxu0
      %522 = vmatprep.mubr.bf16.mxu0 0
      %523 = vmatmul.mubr.bf16.gmra.mxu0 %v437
      %v524 = vpop.f32.mrf.mxu0
      %v525 = vadd.f32 0.0, %v524
      %v526 = vpop.f32.mrf.mxu0
      %v527 = vpop.f32.mrf.mxu0
      %v528 = vadd.f32 0.0, %v527
      %v529 = vpop.f32.mrf.mxu0
      %530 = vmatprep.mubr.bf16.mxu0 0
      %531 = vmatmul.mubr.bf16.gmra.mxu0 %v440
      %v532 = vpop.f32.mrf.mxu0
      %v533 = vadd.f32 0.0, %v532
      %v534 = vpop.f32.mrf.mxu0
      %v535 = vpop.f32.mrf.mxu0
      %v536 = vadd.f32 0.0, %v535
      %v537 = vpop.f32.mrf.mxu0
      %538 = vdwg.mxu0
      %v541 = vunpack.c.l.b16 %v407
      %v542 = vunpack.c.l.b16 %v408
      %v543 = vpack.c.b16 %v542, %v541
      %v546 = vsel %vm417, %v375, 0
      %v549 = vsel %vm417, %v376, 0
      %v552 = vsel %vm417, %v377, 0
      %v555 = vsel %vm417, %v378, 0
      %v558 = vsel %vm417, %v379, 0
      %v561 = vsel %vm417, %v380, 0
      %v564 = vsel %vm417, %v381, 0
      %v567 = vsel %vm417, %v382, 0
      %569 = vmatprep.subr.bf16.mxu0 0
      %570 = vmatpush1.bf16.msra.mxu0 0
      %571 = vmatprep.subr.bf16.mxu0 0
      %572 = vmatpush1.bf16.msra.mxu0 0
      %573 = vmatprep.subr.bf16.mxu0 0
      %574 = vmatpush1.bf16.msra.mxu0 0
      %575 = vmatprep.subr.bf16.mxu0 0
      %576 = vmatpush1.bf16.msra.mxu0 0
      %577 = vmatprep.subr.bf16.mxu0 0
      %578 = vmatpush1.bf16.msra.mxu0 0
      %579 = vmatprep.subr.bf16.mxu0 0
      %580 = vmatpush1.bf16.msra.mxu0 0
      %581 = vmatprep.subr.bf16.mxu0 0
      %582 = vmatpush1.bf16.msra.mxu0 0
      %583 = vmatprep.subr.bf16.mxu0 0
      %584 = vmatpush1.bf16.msra.mxu0 %v543
      %585 = vmatprep.subr.bf16.mxu0 0
      %586 = vmatpush2.bf16.msra.mxu0 0
      %587 = vmatprep.subr.bf16.mxu0 0
      %588 = vmatpush2.bf16.msra.mxu0 0
      %589 = vmatprep.subr.bf16.mxu0 0
      %590 = vmatpush2.bf16.msra.mxu0 0
      %591 = vmatprep.subr.bf16.mxu0 0
      %592 = vmatpush2.bf16.msra.mxu0 0
      %593 = vmatprep.subr.bf16.mxu0 0
      %594 = vmatpush2.bf16.msra.mxu0 0
      %595 = vmatprep.subr.bf16.mxu0 0
      %596 = vmatpush2.bf16.msra.mxu0 0
      %597 = vmatprep.subr.bf16.mxu0 0
      %598 = vmatpush2.bf16.msra.mxu0 0
      %599 = vmatprep.subr.bf16.mxu0 0
      %600 = vmatpush2.bf16.msra.mxu0 0
      %601 = vmatprep.mubr.bf16.mxu0 0
      %602 = vmatmul.mubr.bf16.gmra.mxu0 %v546
      %v603 = vpop.f32.mrf.mxu0
      %v604 = vadd.f32 %v477, %v603
      %v605 = vpop.f32.mrf.mxu0
      %v606 = vpop.f32.mrf.mxu0
      %v607 = vadd.f32 %v480, %v606
      %v608 = vpop.f32.mrf.mxu0
      %609 = vmatprep.mubr.bf16.mxu0 0
      %610 = vmatmul.mubr.bf16.gmra.mxu0 %v549
      %v611 = vpop.f32.mrf.mxu0
      %v612 = vadd.f32 %v485, %v611
      %v613 = vpop.f32.mrf.mxu0
      %v614 = vpop.f32.mrf.mxu0
      %v615 = vadd.f32 %v488, %v614
      %v616 = vpop.f32.mrf.mxu0
      %617 = vmatprep.mubr.bf16.mxu0 0
      %618 = vmatmul.mubr.bf16.gmra.mxu0 %v552
      %v619 = vpop.f32.mrf.mxu0
      %v620 = vadd.f32 %v493, %v619
      %v621 = vpop.f32.mrf.mxu0
      %v622 = vpop.f32.mrf.mxu0
      %v623 = vadd.f32 %v496, %v622
      %v624 = vpop.f32.mrf.mxu0
      %625 = vmatprep.mubr.bf16.mxu0 0
      %626 = vmatmul.mubr.bf16.gmra.mxu0 %v555
      %v627 = vpop.f32.mrf.mxu0
      %v628 = vadd.f32 %v501, %v627
      %v629 = vpop.f32.mrf.mxu0
      %v630 = vpop.f32.mrf.mxu0
      %v631 = vadd.f32 %v504, %v630
      %v632 = vpop.f32.mrf.mxu0
      %633 = vmatprep.mubr.bf16.mxu0 0
      %634 = vmatmul.mubr.bf16.gmra.mxu0 %v558
      %v635 = vpop.f32.mrf.mxu0
      %v636 = vadd.f32 %v509, %v635
      %v637 = vpop.f32.mrf.mxu0
      %v638 = vpop.f32.mrf.mxu0
      %v639 = vadd.f32 %v512, %v638
      %v640 = vpop.f32.mrf.mxu0
      %641 = vmatprep.mubr.bf16.mxu0 0
      %642 = vmatmul.mubr.bf16.gmra.mxu0 %v561
      %v643 = vpop.f32.mrf.mxu0
      %v644 = vadd.f32 %v517, %v643
      %v645 = vpop.f32.mrf.mxu0
      %v646 = vpop.f32.mrf.mxu0
      %v647 = vadd.f32 %v520, %v646
      %v648 = vpop.f32.mrf.mxu0
      %649 = vmatprep.mubr.bf16.mxu0 0
      %650 = vmatmul.mubr.bf16.gmra.mxu0 %v564
      %v651 = vpop.f32.mrf.mxu0
      %v652 = vadd.f32 %v525, %v651
      %v653 = vpop.f32.mrf.mxu0
      %v654 = vpop.f32.mrf.mxu0
      %v655 = vadd.f32 %v528, %v654
      %v656 = vpop.f32.mrf.mxu0
      %657 = vmatprep.mubr.bf16.mxu0 0
      %658 = vmatmul.mubr.bf16.gmra.mxu0 %v567
      %v659 = vpop.f32.mrf.mxu0
      %v660 = vadd.f32 %v533, %v659
      %v661 = vpop.f32.mrf.mxu0
      %v662 = vpop.f32.mrf.mxu0
      %v663 = vadd.f32 %v536, %v662
      %v664 = vpop.f32.mrf.mxu0
      %665 = vdwg.mxu0
      %v666 = vld [vmem:[%s4] sm:$0x1]
      %v668 = vlaneseq
      %v669 = vshrl.u32 %v668, 7
      %v670 = vsub.s32 0, %v669
      %v671 = vrot.slane %v666, %v670
      %v673 = vadd.f32 %v604, %v671
      %v674 = vadd.f32 %v607, %v671
      %v675 = vadd.f32 %v612, %v671
      %v676 = vadd.f32 %v615, %v671
      %v677 = vadd.f32 %v620, %v671
      %v678 = vadd.f32 %v623, %v671
      %v679 = vadd.f32 %v628, %v671
      %v680 = vadd.f32 %v631, %v671
      %v681 = vadd.f32 %v636, %v671
      %v682 = vadd.f32 %v639, %v671
      %v683 = vadd.f32 %v644, %v671
      %v684 = vadd.f32 %v647, %v671
      %v685 = vadd.f32 %v652, %v671
      %v686 = vadd.f32 %v655, %v671
      %v687 = vadd.f32 %v660, %v671
      %v688 = vadd.f32 %v663, %v671
      %vm689 = vcmp.gt.f32.partialorder %v673, 0.0
      %vm690 = vcmp.gt.f32.partialorder %v674, 0.0
      %vm691 = vcmp.gt.f32.partialorder %v675, 0.0
      %vm692 = vcmp.gt.f32.partialorder %v676, 0.0
      %vm693 = vcmp.gt.f32.partialorder %v677, 0.0
      %vm694 = vcmp.gt.f32.partialorder %v678, 0.0
      %vm695 = vcmp.gt.f32.partialorder %v679, 0.0
      %vm696 = vcmp.gt.f32.partialorder %v680, 0.0
      %vm697 = vcmp.gt.f32.partialorder %v681, 0.0
      %vm698 = vcmp.gt.f32.partialorder %v682, 0.0
      %vm699 = vcmp.gt.f32.partialorder %v683, 0.0
      %vm700 = vcmp.gt.f32.partialorder %v684, 0.0
      %vm701 = vcmp.gt.f32.partialorder %v685, 0.0
      %vm702 = vcmp.gt.f32.partialorder %v686, 0.0
      %vm703 = vcmp.gt.f32.partialorder %v687, 0.0
      %vm704 = vcmp.gt.f32.partialorder %v688, 0.0
      %v705 = vmul.f32 %v673, 0.01
      %v706 = vmul.f32 %v674, 0.01
      %v707 = vmul.f32 %v675, 0.01
      %v708 = vmul.f32 %v676, 0.01
      %v709 = vmul.f32 %v677, 0.01
      %v710 = vmul.f32 %v678, 0.01
      %v711 = vmul.f32 %v679, 0.01
      %v712 = vmul.f32 %v680, 0.01
      %v713 = vmul.f32 %v681, 0.01
      %v714 = vmul.f32 %v682, 0.01
      %v715 = vmul.f32 %v683, 0.01
      %v716 = vmul.f32 %v684, 0.01
      %v717 = vmul.f32 %v685, 0.01
      %v718 = vmul.f32 %v686, 0.01
      %v719 = vmul.f32 %v687, 0.01
      %v720 = vmul.f32 %v688, 0.01
      %v721 = vsel %vm689, %v673, %v705
      %v722 = vsel %vm690, %v674, %v706
      %v723 = vsel %vm691, %v675, %v707
      %v724 = vsel %vm692, %v676, %v708
      %v725 = vsel %vm693, %v677, %v709
      %v726 = vsel %vm694, %v678, %v710
      %v727 = vsel %vm695, %v679, %v711
      %v728 = vsel %vm696, %v680, %v712
      %v729 = vsel %vm697, %v681, %v713
      %v730 = vsel %vm698, %v682, %v714
      %v731 = vsel %vm699, %v683, %v715
      %v732 = vsel %vm700, %v684, %v716
      %v733 = vsel %vm701, %v685, %v717
      %v734 = vsel %vm702, %v686, %v718
      %v735 = vsel %vm703, %v687, %v719
      %v736 = vsel %vm704, %v688, %v720
      %v737 = vpack.c.bf16 %v722, %v721
      %v738 = vpack.c.bf16 %v724, %v723
      %v739 = vpack.c.bf16 %v726, %v725
      %v740 = vpack.c.bf16 %v728, %v727
      %v741 = vpack.c.bf16 %v730, %v729
      %v742 = vpack.c.bf16 %v732, %v731
      %v743 = vpack.c.bf16 %v734, %v733
      %v744 = vpack.c.bf16 %v736, %v735
      %v745 = vld [vmem:[%s5] sm:$0xf]
      %v746 = vld [vmem:[%s5 + $0x4] sm:$0xf]
      %v747 = vld [vmem:[%s5 + $0x8] sm:$0xf]
      %v748 = vld [vmem:[%s5 + $0xc] sm:$0xf]
      %v749 = vld [vmem:[%s6] sm:$0x1]
      %v751 = vlaneseq
      %v752 = vshrl.u32 %v751, 7
      %v753 = vsub.s32 0, %v752
      %v754 = vrot.slane %v749, %v753
      %v760 = vunpack.c.l.b16 %v745
      %v761 = vunpack.c.l.b16 %v746
      %v762 = vunpack.c.l.b16 %v747
      %v763 = vunpack.c.l.b16 %v748
      %v764 = vpack.c.b16 %v761, %v760
      %v765 = vpack.c.b16 %v763, %v762
      %vm768 = vcmask 261120
      %v770 = vsel %vm768, %v737, 0
      %v773 = vsel %vm768, %v738, 0
      %v776 = vsel %vm768, %v739, 0
      %v779 = vsel %vm768, %v740, 0
      %v782 = vsel %vm768, %v741, 0
      %v785 = vsel %vm768, %v742, 0
      %v788 = vsel %vm768, %v743, 0
      %v791 = vsel %vm768, %v744, 0
      %793 = vmatprep.subr.bf16.mxu0 0
      %794 = vmatpush1.bf16.msra.mxu0 0
      %795 = vmatprep.subr.bf16.mxu0 0
      %796 = vmatpush1.bf16.msra.mxu0 0
      %797 = vmatprep.subr.bf16.mxu0 0
      %798 = vmatpush1.bf16.msra.mxu0 0
      %799 = vmatprep.subr.bf16.mxu0 0
      %800 = vmatpush1.bf16.msra.mxu0 0
      %801 = vmatprep.subr.bf16.mxu0 0
      %802 = vmatpush1.bf16.msra.mxu0 0
      %803 = vmatprep.subr.bf16.mxu0 0
      %804 = vmatpush1.bf16.msra.mxu0 0
      %805 = vmatprep.subr.bf16.mxu0 0
      %806 = vmatpush1.bf16.msra.mxu0 %v765
      %807 = vmatprep.subr.bf16.mxu0 0
      %808 = vmatpush1.bf16.msra.mxu0 %v764
      %809 = vmatprep.subr.bf16.mxu0 0
      %810 = vmatpush2.bf16.msra.mxu0 0
      %811 = vmatprep.subr.bf16.mxu0 0
      %812 = vmatpush2.bf16.msra.mxu0 0
      %813 = vmatprep.subr.bf16.mxu0 0
      %814 = vmatpush2.bf16.msra.mxu0 0
      %815 = vmatprep.subr.bf16.mxu0 0
      %816 = vmatpush2.bf16.msra.mxu0 0
      %817 = vmatprep.subr.bf16.mxu0 0
      %818 = vmatpush2.bf16.msra.mxu0 0
      %819 = vmatprep.subr.bf16.mxu0 0
      %820 = vmatpush2.bf16.msra.mxu0 0
      %821 = vmatprep.subr.bf16.mxu0 0
      %822 = vmatpush2.bf16.msra.mxu0 0
      %823 = vmatprep.subr.bf16.mxu0 0
      %824 = vmatpush2.bf16.msra.mxu0 0
      %825 = vmatprep.mubr.bf16.mxu0 0
      %826 = vmatmul.mubr.bf16.gmra.mxu0 %v770
      %v827 = vpop.f32.mrf.mxu0
      %v828 = vadd.f32 %v754, %v827
      %v829 = vpop.f32.mrf.mxu0
      %v830 = vpop.f32.mrf.mxu0
      %v831 = vadd.f32 %v754, %v830
      %v832 = vpop.f32.mrf.mxu0
      %833 = vmatprep.mubr.bf16.mxu0 0
      %834 = vmatmul.mubr.bf16.gmra.mxu0 %v773
      %v835 = vpop.f32.mrf.mxu0
      %v836 = vadd.f32 %v754, %v835
      %v837 = vpop.f32.mrf.mxu0
      %v838 = vpop.f32.mrf.mxu0
      %v839 = vadd.f32 %v754, %v838
      %v840 = vpop.f32.mrf.mxu0
      %841 = vmatprep.mubr.bf16.mxu0 0
      %842 = vmatmul.mubr.bf16.gmra.mxu0 %v776
      %v843 = vpop.f32.mrf.mxu0
      %v844 = vadd.f32 %v754, %v843
      %v845 = vpop.f32.mrf.mxu0
      %v846 = vpop.f32.mrf.mxu0
      %v847 = vadd.f32 %v754, %v846
      %v848 = vpop.f32.mrf.mxu0
      %849 = vmatprep.mubr.bf16.mxu0 0
      %850 = vmatmul.mubr.bf16.gmra.mxu0 %v779
      %v851 = vpop.f32.mrf.mxu0
      %v852 = vadd.f32 %v754, %v851
      %v853 = vpop.f32.mrf.mxu0
      %v854 = vpop.f32.mrf.mxu0
      %v855 = vadd.f32 %v754, %v854
      %v856 = vpop.f32.mrf.mxu0
      %857 = vmatprep.mubr.bf16.mxu0 0
      %858 = vmatmul.mubr.bf16.gmra.mxu0 %v782
      %v859 = vpop.f32.mrf.mxu0
      %v860 = vadd.f32 %v754, %v859
      %v861 = vpop.f32.mrf.mxu0
      %v862 = vpop.f32.mrf.mxu0
      %v863 = vadd.f32 %v754, %v862
      %v864 = vpop.f32.mrf.mxu0
      %865 = vmatprep.mubr.bf16.mxu0 0
      %866 = vmatmul.mubr.bf16.gmra.mxu0 %v785
      %v867 = vpop.f32.mrf.mxu0
      %v868 = vadd.f32 %v754, %v867
      %v869 = vpop.f32.mrf.mxu0
      %v870 = vpop.f32.mrf.mxu0
      %v871 = vadd.f32 %v754, %v870
      %v872 = vpop.f32.mrf.mxu0
      %873 = vmatprep.mubr.bf16.mxu0 0
      %874 = vmatmul.mubr.bf16.gmra.mxu0 %v788
      %v875 = vpop.f32.mrf.mxu0
      %v876 = vadd.f32 %v754, %v875
      %v877 = vpop.f32.mrf.mxu0
      %v878 = vpop.f32.mrf.mxu0
      %v879 = vadd.f32 %v754, %v878
      %v880 = vpop.f32.mrf.mxu0
      %881 = vmatprep.mubr.bf16.mxu0 0
      %882 = vmatmul.mubr.bf16.gmra.mxu0 %v791
      %v883 = vpop.f32.mrf.mxu0
      %v884 = vadd.f32 %v754, %v883
      %v885 = vpop.f32.mrf.mxu0
      %v886 = vpop.f32.mrf.mxu0
      %v887 = vadd.f32 %v754, %v886
      %v888 = vpop.f32.mrf.mxu0
      %889 = vdwg.mxu0
      %vm890 = vcmp.gt.f32.partialorder %v828, 0.0
      %vm891 = vcmp.gt.f32.partialorder %v831, 0.0
      %vm892 = vcmp.gt.f32.partialorder %v836, 0.0
      %vm893 = vcmp.gt.f32.partialorder %v839, 0.0
      %vm894 = vcmp.gt.f32.partialorder %v844, 0.0
      %vm895 = vcmp.gt.f32.partialorder %v847, 0.0
      %vm896 = vcmp.gt.f32.partialorder %v852, 0.0
      %vm897 = vcmp.gt.f32.partialorder %v855, 0.0
      %vm898 = vcmp.gt.f32.partialorder %v860, 0.0
      %vm899 = vcmp.gt.f32.partialorder %v863, 0.0
      %vm900 = vcmp.gt.f32.partialorder %v868, 0.0
      %vm901 = vcmp.gt.f32.partialorder %v871, 0.0
      %vm902 = vcmp.gt.f32.partialorder %v876, 0.0
      %vm903 = vcmp.gt.f32.partialorder %v879, 0.0
      %vm904 = vcmp.gt.f32.partialorder %v884, 0.0
      %vm905 = vcmp.gt.f32.partialorder %v887, 0.0
      %v906 = vmul.f32 %v828, 0.01
      %v907 = vmul.f32 %v831, 0.01
      %v908 = vmul.f32 %v836, 0.01
      %v909 = vmul.f32 %v839, 0.01
      %v910 = vmul.f32 %v844, 0.01
      %v911 = vmul.f32 %v847, 0.01
      %v912 = vmul.f32 %v852, 0.01
      %v913 = vmul.f32 %v855, 0.01
      %v914 = vmul.f32 %v860, 0.01
      %v915 = vmul.f32 %v863, 0.01
      %v916 = vmul.f32 %v868, 0.01
      %v917 = vmul.f32 %v871, 0.01
      %v918 = vmul.f32 %v876, 0.01
      %v919 = vmul.f32 %v879, 0.01
      %v920 = vmul.f32 %v884, 0.01
      %v921 = vmul.f32 %v887, 0.01
      %v922 = vsel %vm890, %v828, %v906
      %v923 = vsel %vm891, %v831, %v907
      %v924 = vsel %vm892, %v836, %v908
      %v925 = vsel %vm893, %v839, %v909
      %v926 = vsel %vm894, %v844, %v910
      %v927 = vsel %vm895, %v847, %v911
      %v928 = vsel %vm896, %v852, %v912
      %v929 = vsel %vm897, %v855, %v913
      %v930 = vsel %vm898, %v860, %v914
      %v931 = vsel %vm899, %v863, %v915
      %v932 = vsel %vm900, %v868, %v916
      %v933 = vsel %vm901, %v871, %v917
      %v934 = vsel %vm902, %v876, %v918
      %v935 = vsel %vm903, %v879, %v919
      %v936 = vsel %vm904, %v884, %v920
      %v937 = vsel %vm905, %v887, %v921
      %v938 = vpack.c.bf16 %v923, %v922
      %v939 = vpack.c.bf16 %v925, %v924
      %v940 = vpack.c.bf16 %v927, %v926
      %v941 = vpack.c.bf16 %v929, %v928
      %v942 = vpack.c.bf16 %v931, %v930
      %v943 = vpack.c.bf16 %v933, %v932
      %v944 = vpack.c.bf16 %v935, %v934
      %v945 = vpack.c.bf16 %v937, %v936
      %v946 = vld [vmem:[%s7] sm:$0xf]
      %v947 = vld [vmem:[%s7 + $0x4] sm:$0xf]
      %v948 = vld [vmem:[%s7 + $0x8] sm:$0xf]
      %v949 = vld [vmem:[%s7 + $0xc] sm:$0xf]
      %v950 = vld [vmem:[%s8] sm:$0x1]
      %v952 = vlaneseq
      %v953 = vshrl.u32 %v952, 7
      %v954 = vsub.s32 0, %v953
      %v955 = vrot.slane %v950, %v954
      %v961 = vunpack.c.l.b16 %v946
      %v962 = vunpack.c.l.b16 %v947
      %v963 = vunpack.c.l.b16 %v948
      %v964 = vunpack.c.l.b16 %v949
      %v965 = vpack.c.b16 %v962, %v961
      %v966 = vpack.c.b16 %v964, %v963
      %v970 = vsel %vm768, %v938, 0
      %v973 = vsel %vm768, %v939, 0
      %v976 = vsel %vm768, %v940, 0
      %v979 = vsel %vm768, %v941, 0
      %v982 = vsel %vm768, %v942, 0
      %v985 = vsel %vm768, %v943, 0
      %v988 = vsel %vm768, %v944, 0
      %v991 = vsel %vm768, %v945, 0
      %993 = vmatprep.subr.bf16.mxu0 0
      %994 = vmatpush1.bf16.msra.mxu0 0
      %995 = vmatprep.subr.bf16.mxu0 0
      %996 = vmatpush1.bf16.msra.mxu0 0
      %997 = vmatprep.subr.bf16.mxu0 0
      %998 = vmatpush1.bf16.msra.mxu0 0
      %999 = vmatprep.subr.bf16.mxu0 0
      %1000 = vmatpush1.bf16.msra.mxu0 0
      %1001 = vmatprep.subr.bf16.mxu0 0
      %1002 = vmatpush1.bf16.msra.mxu0 0
      %1003 = vmatprep.subr.bf16.mxu0 0
      %1004 = vmatpush1.bf16.msra.mxu0 0
      %1005 = vmatprep.subr.bf16.mxu0 0
      %1006 = vmatpush1.bf16.msra.mxu0 %v966
      %1007 = vmatprep.subr.bf16.mxu0 0
      %1008 = vmatpush1.bf16.msra.mxu0 %v965
      %1009 = vmatprep.subr.bf16.mxu0 0
      %1010 = vmatpush2.bf16.msra.mxu0 0
      %1011 = vmatprep.subr.bf16.mxu0 0
      %1012 = vmatpush2.bf16.msra.mxu0 0
      %1013 = vmatprep.subr.bf16.mxu0 0
      %1014 = vmatpush2.bf16.msra.mxu0 0
      %1015 = vmatprep.subr.bf16.mxu0 0
      %1016 = vmatpush2.bf16.msra.mxu0 0
      %1017 = vmatprep.subr.bf16.mxu0 0
      %1018 = vmatpush2.bf16.msra.mxu0 0
      %1019 = vmatprep.subr.bf16.mxu0 0
      %1020 = vmatpush2.bf16.msra.mxu0 0
      %1021 = vmatprep.subr.bf16.mxu0 0
      %1022 = vmatpush2.bf16.msra.mxu0 0
      %1023 = vmatprep.subr.bf16.mxu0 0
      %1024 = vmatpush2.bf16.msra.mxu0 0
      %1025 = vmatprep.mubr.bf16.mxu0 0
      %1026 = vmatmul.mubr.bf16.gmra.mxu0 %v970
      %v1027 = vpop.f32.mrf.mxu0
      %v1028 = vadd.f32 %v955, %v1027
      %v1029 = vpop.f32.mrf.mxu0
      %v1030 = vpop.f32.mrf.mxu0
      %v1031 = vadd.f32 %v955, %v1030
      %v1032 = vpop.f32.mrf.mxu0
      %1033 = vmatprep.mubr.bf16.mxu0 0
      %1034 = vmatmul.mubr.bf16.gmra.mxu0 %v973
      %v1035 = vpop.f32.mrf.mxu0
      %v1036 = vadd.f32 %v955, %v1035
      %v1037 = vpop.f32.mrf.mxu0
      %v1038 = vpop.f32.mrf.mxu0
      %v1039 = vadd.f32 %v955, %v1038
      %v1040 = vpop.f32.mrf.mxu0
      %1041 = vmatprep.mubr.bf16.mxu0 0
      %1042 = vmatmul.mubr.bf16.gmra.mxu0 %v976
      %v1043 = vpop.f32.mrf.mxu0
      %v1044 = vadd.f32 %v955, %v1043
      %v1045 = vpop.f32.mrf.mxu0
      %v1046 = vpop.f32.mrf.mxu0
      %v1047 = vadd.f32 %v955, %v1046
      %v1048 = vpop.f32.mrf.mxu0
      %1049 = vmatprep.mubr.bf16.mxu0 0
      %1050 = vmatmul.mubr.bf16.gmra.mxu0 %v979
      %v1051 = vpop.f32.mrf.mxu0
      %v1052 = vadd.f32 %v955, %v1051
      %v1053 = vpop.f32.mrf.mxu0
      %v1054 = vpop.f32.mrf.mxu0
      %v1055 = vadd.f32 %v955, %v1054
      %v1056 = vpop.f32.mrf.mxu0
      %1057 = vmatprep.mubr.bf16.mxu0 0
      %1058 = vmatmul.mubr.bf16.gmra.mxu0 %v982
      %v1059 = vpop.f32.mrf.mxu0
      %v1060 = vadd.f32 %v955, %v1059
      %v1061 = vpop.f32.mrf.mxu0
      %v1062 = vpop.f32.mrf.mxu0
      %v1063 = vadd.f32 %v955, %v1062
      %v1064 = vpop.f32.mrf.mxu0
      %1065 = vmatprep.mubr.bf16.mxu0 0
      %1066 = vmatmul.mubr.bf16.gmra.mxu0 %v985
      %v1067 = vpop.f32.mrf.mxu0
      %v1068 = vadd.f32 %v955, %v1067
      %v1069 = vpop.f32.mrf.mxu0
      %v1070 = vpop.f32.mrf.mxu0
      %v1071 = vadd.f32 %v955, %v1070
      %v1072 = vpop.f32.mrf.mxu0
      %1073 = vmatprep.mubr.bf16.mxu0 0
      %1074 = vmatmul.mubr.bf16.gmra.mxu0 %v988
      %v1075 = vpop.f32.mrf.mxu0
      %v1076 = vadd.f32 %v955, %v1075
      %v1077 = vpop.f32.mrf.mxu0
      %v1078 = vpop.f32.mrf.mxu0
      %v1079 = vadd.f32 %v955, %v1078
      %v1080 = vpop.f32.mrf.mxu0
      %1081 = vmatprep.mubr.bf16.mxu0 0
      %1082 = vmatmul.mubr.bf16.gmra.mxu0 %v991
      %v1083 = vpop.f32.mrf.mxu0
      %v1084 = vadd.f32 %v955, %v1083
      %v1085 = vpop.f32.mrf.mxu0
      %v1086 = vpop.f32.mrf.mxu0
      %v1087 = vadd.f32 %v955, %v1086
      %v1088 = vpop.f32.mrf.mxu0
      %1089 = vdwg.mxu0
      %vm1090 = vcmask 64512
      %v1091 = vsel %vm1090, %v1028, -inf
      %1092 = vmax.xlane.f32.xlu0 %v1091
      %v1093 = vpop.xlane.xlu0 %1092
      %v1094 = vsel %vm1090, %v1031, -inf
      %1095 = vmax.xlane.f32.xlu0 %v1094
      %v1096 = vpop.xlane.xlu0 %1095
      %v1097 = vsel %vm1090, %v1036, -inf
      %1098 = vmax.xlane.f32.xlu0 %v1097
      %v1099 = vpop.xlane.xlu0 %1098
      %v1100 = vsel %vm1090, %v1039, -inf
      %1101 = vmax.xlane.f32.xlu0 %v1100
      %v1102 = vpop.xlane.xlu0 %1101
      %v1103 = vsel %vm1090, %v1044, -inf
      %1104 = vmax.xlane.f32.xlu0 %v1103
      %v1105 = vpop.xlane.xlu0 %1104
      %v1106 = vsel %vm1090, %v1047, -inf
      %1107 = vmax.xlane.f32.xlu0 %v1106
      %v1108 = vpop.xlane.xlu0 %1107
      %v1109 = vsel %vm1090, %v1052, -inf
      %1110 = vmax.xlane.f32.xlu0 %v1109
      %v1111 = vpop.xlane.xlu0 %1110
      %v1112 = vsel %vm1090, %v1055, -inf
      %1113 = vmax.xlane.f32.xlu0 %v1112
      %v1114 = vpop.xlane.xlu0 %1113
      %v1115 = vsel %vm1090, %v1060, -inf
      %1116 = vmax.xlane.f32.xlu0 %v1115
      %v1117 = vpop.xlane.xlu0 %1116
      %v1118 = vsel %vm1090, %v1063, -inf
      %1119 = vmax.xlane.f32.xlu0 %v1118
      %v1120 = vpop.xlane.xlu0 %1119
      %v1121 = vsel %vm1090, %v1068, -inf
      %1122 = vmax.xlane.f32.xlu0 %v1121
      %v1123 = vpop.xlane.xlu0 %1122
      %v1124 = vsel %vm1090, %v1071, -inf
      %1125 = vmax.xlane.f32.xlu0 %v1124
      %v1126 = vpop.xlane.xlu0 %1125
      %v1127 = vsel %vm1090, %v1076, -inf
      %1128 = vmax.xlane.f32.xlu0 %v1127
      %v1129 = vpop.xlane.xlu0 %1128
      %v1130 = vsel %vm1090, %v1079, -inf
      %1131 = vmax.xlane.f32.xlu0 %v1130
      %v1132 = vpop.xlane.xlu0 %1131
      %v1133 = vsel %vm1090, %v1084, -inf
      %1134 = vmax.xlane.f32.xlu0 %v1133
      %v1135 = vpop.xlane.xlu0 %1134
      %v1136 = vsel %vm1090, %v1087, -inf
      %1137 = vmax.xlane.f32.xlu0 %v1136
      %v1138 = vpop.xlane.xlu0 %1137
      %v1139 = vsub.f32 %v1028, %v1093
      %v1140 = vsub.f32 %v1031, %v1096
      %v1141 = vsub.f32 %v1036, %v1099
      %v1142 = vsub.f32 %v1039, %v1102
      %v1143 = vsub.f32 %v1044, %v1105
      %v1144 = vsub.f32 %v1047, %v1108
      %v1145 = vsub.f32 %v1052, %v1111
      %v1146 = vsub.f32 %v1055, %v1114
      %v1147 = vsub.f32 %v1060, %v1117
      %v1148 = vsub.f32 %v1063, %v1120
      %v1149 = vsub.f32 %v1068, %v1123
      %v1150 = vsub.f32 %v1071, %v1126
      %v1151 = vsub.f32 %v1076, %v1129
      %v1152 = vsub.f32 %v1079, %v1132
      %v1153 = vsub.f32 %v1084, %v1135
      %v1154 = vsub.f32 %v1087, %v1138
      %v1155 = vmul.f32 %v1139, 1.442695
      %v1156 = vpow.pop %v1155
      %v1157 = vmul.f32 %v1140, 1.442695
      %v1158 = vpow.pop %v1157
      %v1159 = vmul.f32 %v1141, 1.442695
      %v1160 = vpow.pop %v1159
      %v1161 = vmul.f32 %v1142, 1.442695
      %v1162 = vpow.pop %v1161
      %v1163 = vmul.f32 %v1143, 1.442695
      %v1164 = vpow.pop %v1163
      %v1165 = vmul.f32 %v1144, 1.442695
      %v1166 = vpow.pop %v1165
      %v1167 = vmul.f32 %v1145, 1.442695
      %v1168 = vpow.pop %v1167
      %v1169 = vmul.f32 %v1146, 1.442695
      %v1170 = vpow.pop %v1169
      %v1171 = vmul.f32 %v1147, 1.442695
      %v1172 = vpow.pop %v1171
      %v1173 = vmul.f32 %v1148, 1.442695
      %v1174 = vpow.pop %v1173
      %v1175 = vmul.f32 %v1149, 1.442695
      %v1176 = vpow.pop %v1175
      %v1177 = vmul.f32 %v1150, 1.442695
      %v1178 = vpow.pop %v1177
      %v1179 = vmul.f32 %v1151, 1.442695
      %v1180 = vpow.pop %v1179
      %v1181 = vmul.f32 %v1152, 1.442695
      %v1182 = vpow.pop %v1181
      %v1183 = vmul.f32 %v1153, 1.442695
      %v1184 = vpow.pop %v1183
      %v1185 = vmul.f32 %v1154, 1.442695
      %v1186 = vpow.pop %v1185
      %v1187 = vsel %vm1090, %v1156, 0.0
      %1188 = vadd.xlane.f32.xlu0 %v1187
      %v1189 = vpop.xlane.xlu0 %1188
      %v1190 = vsel %vm1090, %v1158, 0.0
      %1191 = vadd.xlane.f32.xlu0 %v1190
      %v1192 = vpop.xlane.xlu0 %1191
      %v1193 = vsel %vm1090, %v1160, 0.0
      %1194 = vadd.xlane.f32.xlu0 %v1193
      %v1195 = vpop.xlane.xlu0 %1194
      %v1196 = vsel %vm1090, %v1162, 0.0
      %1197 = vadd.xlane.f32.xlu0 %v1196
      %v1198 = vpop.xlane.xlu0 %1197
      %v1199 = vsel %vm1090, %v1164, 0.0
      %1200 = vadd.xlane.f32.xlu0 %v1199
      %v1201 = vpop.xlane.xlu0 %1200
      %v1202 = vsel %vm1090, %v1166, 0.0
      %1203 = vadd.xlane.f32.xlu0 %v1202
      %v1204 = vpop.xlane.xlu0 %1203
      %v1205 = vsel %vm1090, %v1168, 0.0
      %1206 = vadd.xlane.f32.xlu0 %v1205
      %v1207 = vpop.xlane.xlu0 %1206
      %v1208 = vsel %vm1090, %v1170, 0.0
      %1209 = vadd.xlane.f32.xlu0 %v1208
      %v1210 = vpop.xlane.xlu0 %1209
      %v1211 = vsel %vm1090, %v1172, 0.0
      %1212 = vadd.xlane.f32.xlu0 %v1211
      %v1213 = vpop.xlane.xlu0 %1212
      %v1214 = vsel %vm1090, %v1174, 0.0
      %1215 = vadd.xlane.f32.xlu0 %v1214
      %v1216 = vpop.xlane.xlu0 %1215
      %v1217 = vsel %vm1090, %v1176, 0.0
      %1218 = vadd.xlane.f32.xlu0 %v1217
      %v1219 = vpop.xlane.xlu0 %1218
      %v1220 = vsel %vm1090, %v1178, 0.0
      %1221 = vadd.xlane.f32.xlu0 %v1220
      %v1222 = vpop.xlane.xlu0 %1221
      %v1223 = vsel %vm1090, %v1180, 0.0
      %1224 = vadd.xlane.f32.xlu0 %v1223
      %v1225 = vpop.xlane.xlu0 %1224
      %v1226 = vsel %vm1090, %v1182, 0.0
      %1227 = vadd.xlane.f32.xlu0 %v1226
      %v1228 = vpop.xlane.xlu0 %1227
      %v1229 = vsel %vm1090, %v1184, 0.0
      %1230 = vadd.xlane.f32.xlu0 %v1229
      %v1231 = vpop.xlane.xlu0 %1230
      %v1232 = vsel %vm1090, %v1186, 0.0
      %1233 = vadd.xlane.f32.xlu0 %v1232
      %v1234 = vpop.xlane.xlu0 %1233
      %v1235 = vrcp.pop %v1189
      %v1236 = vmul.f32 %v1156, %v1235
      %v1237 = vrcp.pop %v1192
      %v1238 = vmul.f32 %v1158, %v1237
      %v1239 = vrcp.pop %v1195
      %v1240 = vmul.f32 %v1160, %v1239
      %v1241 = vrcp.pop %v1198
      %v1242 = vmul.f32 %v1162, %v1241
      %v1243 = vrcp.pop %v1201
      %v1244 = vmul.f32 %v1164, %v1243
      %v1245 = vrcp.pop %v1204
      %v1246 = vmul.f32 %v1166, %v1245
      %v1247 = vrcp.pop %v1207
      %v1248 = vmul.f32 %v1168, %v1247
      %v1249 = vrcp.pop %v1210
      %v1250 = vmul.f32 %v1170, %v1249
      %v1251 = vrcp.pop %v1213
      %v1252 = vmul.f32 %v1172, %v1251
      %v1253 = vrcp.pop %v1216
      %v1254 = vmul.f32 %v1174, %v1253
      %v1255 = vrcp.pop %v1219
      %v1256 = vmul.f32 %v1176, %v1255
      %v1257 = vrcp.pop %v1222
      %v1258 = vmul.f32 %v1178, %v1257
      %v1259 = vrcp.pop %v1225
      %v1260 = vmul.f32 %v1180, %v1259
      %v1261 = vrcp.pop %v1228
      %v1262 = vmul.f32 %v1182, %v1261
      %v1263 = vrcp.pop %v1231
      %v1264 = vmul.f32 %v1184, %v1263
      %v1265 = vrcp.pop %v1234
      %v1266 = vmul.f32 %v1186, %v1265
      %v1267 = vpack.c.bf16 %v1238, %v1236
      %v1268 = vpack.c.bf16 %v1242, %v1240
      %v1269 = vpack.c.bf16 %v1246, %v1244
      %v1270 = vpack.c.bf16 %v1250, %v1248
      %v1271 = vpack.c.bf16 %v1254, %v1252
      %v1272 = vpack.c.bf16 %v1258, %v1256
      %v1273 = vpack.c.bf16 %v1262, %v1260
      %v1274 = vpack.c.bf16 %v1266, %v1264
      %v1283 = vunpack.c.l.b16 %v1267
      %v1284 = vunpack.c.h.b16 %v1267
      %v1285 = vunpack.c.l.b16 %v1268
      %v1286 = vunpack.c.h.b16 %v1268
      %v1287 = vunpack.c.l.b16 %v1269
      %v1288 = vunpack.c.h.b16 %v1269
      %v1289 = vunpack.c.l.b16 %v1270
      %v1290 = vunpack.c.h.b16 %v1270
      %v1291 = vunpack.c.l.b16 %v1271
      %v1292 = vunpack.c.h.b16 %v1271
      %v1293 = vunpack.c.l.b16 %v1272
      %v1294 = vunpack.c.h.b16 %v1272
      %v1295 = vunpack.c.l.b16 %v1273
      %v1296 = vunpack.c.h.b16 %v1273
      %v1297 = vunpack.c.l.b16 %v1274
      %v1298 = vunpack.c.h.b16 %v1274
      %v1299 = vpack.c.b16 %v1283, %v1283
      %v1300 = vpack.c.b16 %v1284, %v1284
      %v1301 = vpack.c.b16 %v1285, %v1285
      %v1302 = vpack.c.b16 %v1286, %v1286
      %v1303 = vpack.c.b16 %v1287, %v1287
      %v1304 = vpack.c.b16 %v1288, %v1288
      %v1305 = vpack.c.b16 %v1289, %v1289
      %v1306 = vpack.c.b16 %v1290, %v1290
      %v1307 = vpack.c.b16 %v1291, %v1291
      %v1308 = vpack.c.b16 %v1292, %v1292
      %v1309 = vpack.c.b16 %v1293, %v1293
      %v1310 = vpack.c.b16 %v1294, %v1294
      %v1311 = vpack.c.b16 %v1295, %v1295
      %v1312 = vpack.c.b16 %v1296, %v1296
      %v1313 = vpack.c.b16 %v1297, %v1297
      %v1314 = vpack.c.b16 %v1298, %v1298
      %vm1331 = vcmask 60416
      %1332 = vst.msk [vmem:[%s356] sm:$0xf] %vm1331, %v1299
      %1333 = vst.msk [vmem:[%s356 + $0x4] sm:$0xf] %vm1331, %v1300
      %1334 = vst.msk [vmem:[%s356 + $0x8] sm:$0xf] %vm1331, %v1301
      %1335 = vst.msk [vmem:[%s356 + $0xc] sm:$0xf] %vm1331, %v1302
      %1336 = vst.msk [vmem:[%s356 + $0x10] sm:$0xf] %vm1331, %v1303
      %1337 = vst.msk [vmem:[%s356 + $0x14] sm:$0xf] %vm1331, %v1304
      %1338 = vst.msk [vmem:[%s356 + $0x18] sm:$0xf] %vm1331, %v1305
      %1339 = vst.msk [vmem:[%s356 + $0x1c] sm:$0xf] %vm1331, %v1306
      %1340 = vst.msk [vmem:[%s356 + $0x20] sm:$0xf] %vm1331, %v1307
      %1341 = vst.msk [vmem:[%s356 + $0x24] sm:$0xf] %vm1331, %v1308
      %1342 = vst.msk [vmem:[%s356 + $0x28] sm:$0xf] %vm1331, %v1309
      %1343 = vst.msk [vmem:[%s356 + $0x2c] sm:$0xf] %vm1331, %v1310
      %1344 = vst.msk [vmem:[%s356 + $0x30] sm:$0xf] %vm1331, %v1311
      %1345 = vst.msk [vmem:[%s356 + $0x34] sm:$0xf] %vm1331, %v1312
      %1346 = vst.msk [vmem:[%s356 + $0x38] sm:$0xf] %vm1331, %v1313
      %1347 = vst.msk [vmem:[%s356 + $0x3c] sm:$0xf] %vm1331, %v1314
      %s1348 = smul.u32 16, %s20
      %p1349 = scmp.lt.s32.totalorder %s1348, 31
      %s1350 = scalar_select %p1349, %s1348, 31
      %s1351 = smul.addr %s1350, 4
      %s1352 = scalar_lea.vmem %s9, %s1351
      // Predicated region
      $region57: #{tpu_custom_call.1} parent=55 // pred_check
        %p1353 = pneg %p237
      $region58: #{tpu_custom_call.1} parent=55 // pred_check_branch
        %1355 = sbr.rel (%p1353) target = $region60
      $region59: #{tpu_custom_call.1} parent=55 // pred_region
        %s1356 = smul.u32 16, %s20
      $region60: #{tpu_custom_call.1} parent=55 // pred_fallthru
        _
    $region56: #{tpu_custom_call.1} parent=5 // pred_fallthru
      _
    %p1357 = scmp.le.s32.totalorder 2, %s15
    // Predicated region
    $region61: #{tpu_custom_call.1} parent=5 // pred_check
      %p1358 = pneg %p1357
    $region62: #{tpu_custom_call.1} parent=5 // pred_check_branch
      %1360 = sbr.rel (%p1358) target = $region64
    $region63: #{tpu_custom_call.1} parent=5 // pred_region
      %s1361 = ssub.s32 %s15, 2
      // Predicated region
      $region65: #{tpu_custom_call.1} parent=63 // pred_check
        %p1362 = pneg %p243
      $region66: #{tpu_custom_call.1} parent=63 // pred_check_branch
        %1364 = sbr.rel (%p1362) target = $region68
      $region67: #{tpu_custom_call.1} parent=63 // pred_region
        %s1365 = smul.u32 16, %s21
        %p1366 = scmp.lt.s32.totalorder %s1365, 31
        %s1367 = scalar_select %p1366, %s1365, 31
        %s1368 = smul.addr %s1367, 4
        %s1369 = scalar_lea.vmem %s9, %s1368
      $region68: #{tpu_custom_call.1} parent=63 // pred_fallthru
        _
    $region64: #{tpu_custom_call.1} parent=5 // pred_fallthru
      _
  $region6: #{tpu_custom_call.1} parent=0 // loop_footer
    %s19 = sadd.s32 1, %s15
  $region7: #{tpu_custom_call.1} parent=0 // loop_footer_branch
    %14 = sbr.rel target = $region3
  $region8: #{tpu_custom_call.1} parent=0 // loop_exit
    _

</llo_original>
